<compile_context>
chip_gen: v7x
topology: tpu7x:2x2x1
jax: 0.10.0
libtpu: 0.0.40
codegen_flags: <defaults>
</compile_context>

<pallas_src>
import functools

import jax
import jax.numpy as jnp
from jax import lax
from jax.experimental import pallas as pl
from jax.experimental.pallas import tpu as pltpu

_LANES = 128  # TPU vreg lane width


def _round_up(a, b):
    return ((a + b - 1) // b) * b


def _tile_reduce(x_ref, n_chunks, col_offset, hw):
    """Per-lane partials for one (tr, n_chunks*128) tile of the (R, HW) input.

    `col_offset` / `hw` are Python ints, so all masking decisions are static:
      * chunks entirely past `hw` are skipped (not even loaded),
      * only the single boundary chunk pays the compare + select cost,
      * all other chunks are pure VPU max/add that co-issue with the loads.
    Returns (part_max [input dtype], part_sum [f32]), each shaped (tr, 128).
    """
    part_max = None
    part_sum = None
    lane = None
    for j in range(n_chunks):
        start = col_offset + j * _LANES
        if start >= hw:
            break  # fully padded chunk: contributes nothing
        chunk = x_ref[:, j * _LANES:(j + 1) * _LANES]
        csum = chunk.astype(jnp.float32)
        if start + _LANES <= hw:
            cmax = chunk  # fully valid chunk: no masking
        else:
            if lane is None:  # (1, 128) iota, broadcast in the compare
                lane = lax.broadcasted_iota(jnp.int32, (1, _LANES), 1)
            valid = (start + lane) < hw
            cmax = jnp.where(valid, chunk, jnp.asarray(-jnp.inf, chunk.dtype))
            csum = jnp.where(valid, csum, 0.0)
        part_max = cmax if part_max is None else jnp.maximum(part_max, cmax)
        part_sum = csum if part_sum is None else part_sum + csum
    return part_max, part_sum


def _finalize(part_max, part_sum, out_ref, hw):
    """Cross-lane reduces + store into the fused (2, tr) output block."""
    # Max reduce on the XLU.
    row_max = jnp.max(part_max, axis=-1)                               # (tr,)
    # Sum reduce on the MXU (ones-column matmul) so the XLU only does one
    # reduce per row; HIGHEST precision keeps the f32 sum exact enough.
    ones_col = jnp.ones((_LANES, 1), dtype=jnp.float32)
    row_sum = jnp.dot(part_sum, ones_col,
                      preferred_element_type=jnp.float32,
                      precision=lax.Precision.HIGHEST)                 # (tr, 1)
    row_avg = row_sum[:, 0] / hw                                       # (tr,)
    out_ref[0, :] = row_max.astype(out_ref.dtype)
    out_ref[1, :] = row_avg.astype(out_ref.dtype)


def _pool_kernel_single(x_ref, out_ref, *, hw):
    """nk == 1 (tk >= H*W): reduce the whole row in one step, no scratch."""
    tk = x_ref.shape[1]
    part_max, part_sum = _tile_reduce(x_ref, tk // _LANES, 0, hw)
    _finalize(part_max, part_sum, out_ref, hw)


def _pool_kernel_multi(x_ref, out_ref, acc_max_ref, acc_sum_ref, *, hw, tk):
    """nk > 1 (H*W > max lane tile): resident per-lane accumulators."""
    k = pl.program_id(1)
    nk = pl.num_programs(1)
    n_chunks = tk // _LANES

    @pl.when(k == 0)
    def _init():
        acc_max_ref[...] = jnp.full_like(acc_max_ref, -jnp.inf)
        acc_sum_ref[...] = jnp.zeros_like(acc_sum_ref)

    def _accum(col_offset):
        part_max, part_sum = _tile_reduce(x_ref, n_chunks, col_offset, hw)
        acc_max_ref[...] = jnp.maximum(acc_max_ref[...], part_max)
        acc_sum_ref[...] = acc_sum_ref[...] + part_sum

    if (hw % tk) != 0:
        # Padding only exists in the final reduction step: mask there only.
        @pl.when(k < nk - 1)
        def _unmasked():
            _accum(0)  # hw > tk here, so every chunk is fully valid

        @pl.when(k == nk - 1)
        def _masked():
            _accum((nk - 1) * tk)
    else:
        _accum(0)

    @pl.when(k == nk - 1)
    def _done():
        _finalize(acc_max_ref[...], acc_sum_ref[...], out_ref, hw)


def adaptive_concat_pool2d(x, *, max_lane_tile=4096, target_tile_bytes=1 << 20):
    """AdaptiveConcatPool2d (output_size=1): (N, C, H, W) -> (N, 2*C, 1, 1)."""
    N, C, H, W = x.shape
    R, HW = N * C, H * W
    x2 = x.reshape(R, HW)  # rows = N*C, lanes = H*W
    dsz = jnp.dtype(x.dtype).itemsize

    # --- tile selection ----------------------------------------------------
    # Lane/reduction tile: whole (128-padded) H*W when it fits, else 4096
    # (safe for v7x's 64 MiB VMEM while still amortizing step overhead).
    tk = min(_round_up(HW, _LANES), max_lane_tile)
    nk = pl.cdiv(HW, tk)

    if nk == 1:
        # Row tile sized so each input tile is ~1 MiB (e.g. tr=2048 for
        # tk=128 f32), multiple of 128 so both input and output blocks meet
        # the (8,128) rule when tr < R.
        tr = max(_LANES, (target_tile_bytes // (tk * dsz)) // _LANES * _LANES)
        if tr >= R:
            # Keep >= 2 blocks on the "parallel" row axis when splittable so
            # both v7x TensorCores get work; otherwise take the full row dim.
            tr = _round_up(pl.cdiv(R, 2), _LANES) if R >= 2 * _LANES else R
    else:
        # Multi-step path (rare: H*W > 4096): 128 rows x 4096 cols keeps the
        # per-step vreg live set (chunk + 2 partial accumulators) under 64.
        tr = _LANES if R > _LANES else R

    # --- VMEM budget (double-buffered input + output + scratch, 2x slack) --
    vmem_est = 2 * tr * tk * dsz + 2 * 2 * tr * dsz
    if nk > 1:
        vmem_est += tr * _LANES * (dsz + 4)
    vmem_limit = int(min(64 << 20, max(32 << 20, 2 * vmem_est)))

    if nk == 1:
        kernel = functools.partial(_pool_kernel_single, hw=HW)
        grid = (pl.cdiv(R, tr),)
        in_specs = [pl.BlockSpec((tr, tk), lambda r: (r, 0))]
        out_specs = pl.BlockSpec((2, tr), lambda r: (0, r))
        scratch_shapes = []
        dims = ("parallel",)
    else:
        kernel = functools.partial(_pool_kernel_multi, hw=HW, tk=tk)
        grid = (pl.cdiv(R, tr), nk)
        in_specs = [pl.BlockSpec((tr, tk), lambda r, k: (r, k))]
        out_specs = pl.BlockSpec((2, tr), lambda r, k: (0, r))
        scratch_shapes = [
            pltpu.VMEM((tr, _LANES), x.dtype),       # running per-lane max
            pltpu.VMEM((tr, _LANES), jnp.float32),   # running per-lane f32 sum
        ]
        dims = ("parallel", "arbitrary")

    out = pl.pallas_call(
        kernel,
        out_shape=jax.ShapeDtypeStruct((2, R), x.dtype),  # row 0: max, row 1: avg
        grid_spec=pltpu.PrefetchScalarGridSpec(
            num_scalar_prefetch=0,
            grid=grid,
            in_specs=in_specs,
            out_specs=out_specs,
            scratch_shapes=scratch_shapes,
        ),
        compiler_params=pltpu.CompilerParams(
            dimension_semantics=dims,
            vmem_limit_bytes=vmem_limit,
        ),
    )(x2)

    # Note: edge row blocks (R % tr != 0) compute on padded garbage rows; this
    # is benign because Pallas masks the out-of-bounds part of the output store.
    # (2, N*C) -> (N, 2*C, 1, 1) with [max-channels || avg-channels], matching
    # torch.cat([mp(x), ap(x)], dim=1).  Tiny reshape/transpose only.
    return out.reshape(2, N, C).transpose(1, 0, 2).reshape(N, 2 * C, 1, 1)

    # TODO(synk): sz > 1 (true adaptive pooling to an sz x sz output grid) is
    # not implemented; the module's default path (output_size=1) is what this
    # kernel reproduces.


def _reference(x):
    return jnp.concatenate(
        [
            jnp.max(x, axis=(2, 3), keepdims=True),   # AdaptiveMaxPool2d(1)
            jnp.mean(x, axis=(2, 3), keepdims=True),  # AdaptiveAvgPool2d(1)
        ],
        axis=1,
    )


if __name__ == "__main__":
    key = jax.random.PRNGKey(0)

    # Primary test: shapes implied by the module usage.
    x = jax.random.normal(key, (2, 4, 16, 16), dtype=jnp.float32)
    out = adaptive_concat_pool2d(x)
    jax.block_until_ready(out)
    assert out.shape == (2, 8, 1, 1), out.shape
    assert out.dtype == x.dtype
    assert jnp.allclose(out, _reference(x), atol=1e-5, rtol=1e-5)

    # H*W not a multiple of 128 (masked boundary chunk, single-step kernel).
    x2 = jax.random.normal(jax.random.PRNGKey(1), (2, 3, 7, 7), dtype=jnp.float32)
    out2 = adaptive_concat_pool2d(x2)
    jax.block_until_ready(out2)
    assert out2.shape == (2, 6, 1, 1)
    assert jnp.allclose(out2, _reference(x2), atol=1e-5, rtol=1e-5)

    # N*C > 256: two row blocks on the parallel axis, partial edge block.
    x3 = jax.random.normal(jax.random.PRNGKey(2), (1, 300, 9, 9), dtype=jnp.float32)
    out3 = adaptive_concat_pool2d(x3)
    jax.block_until_ready(out3)
    assert out3.shape == (1, 600, 1, 1)
    assert jnp.allclose(out3, _reference(x3), atol=1e-5, rtol=1e-5)

    # H*W > 4096: exercises the multi-step kernel (resident accumulators,
    # mask-only-on-last-step, skipped fully-padded chunks).
    x4 = jax.random.normal(jax.random.PRNGKey(3), (2, 3, 70, 70), dtype=jnp.float32)
    out4 = adaptive_concat_pool2d(x4)
    jax.block_until_ready(out4)
    assert out4.shape == (2, 6, 1, 1)
    assert jnp.allclose(out4, _reference(x4), atol=1e-5, rtol=1e-5)

    # bf16 input: max path stays in bf16, sum accumulates in f32.
    x5 = jax.random.normal(jax.random.PRNGKey(4), (2, 64, 7, 7), dtype=jnp.bfloat16)
    out5 = adaptive_concat_pool2d(x5)
    jax.block_until_ready(out5)
    assert out5.shape == (2, 128, 1, 1)
    assert out5.dtype == jnp.bfloat16
    ref5 = _reference(x5.astype(jnp.float32))
    assert jnp.allclose(out5.astype(jnp.float32), ref5, atol=2e-2, rtol=2e-2)

    print("KERNEL_OK")
</pallas_src>

<mosaic_0001>
module attributes {stable_mosaic.version = 11 : i64} {
  func.func @_pool_kernel_single(%arg0: i32, %arg1: memref<8x256xf32, #tpu.memory_space<vmem>>, %arg2: memref<2x8xf32, #tpu.memory_space<vmem>>) attributes {dimension_semantics = [#tpu.dimension_semantics<parallel>], iteration_bounds = array<i64: 1>, scalar_prefetch = 0 : i64, scratch_operands = 0 : i64, tpu.core_type = #tpu.core_type<tc>, window_params = [{transform_indices = @transform_0, window_bounds = array<i64: 8, 256>}, {transform_indices = @transform_1, window_bounds = array<i64: 2, 8>}]} {
    %c0 = arith.constant 0 : index
    %c0_0 = arith.constant 0 : index
    %0 = vector.load %arg1[%c0, %c0_0] : memref<8x256xf32, #tpu.memory_space<vmem>>, vector<8x128xf32>
    %c0_1 = arith.constant 0 : index
    %c128 = arith.constant 128 : index
    %1 = vector.load %arg1[%c0_1, %c128] : memref<8x256xf32, #tpu.memory_space<vmem>>, vector<8x128xf32>
    %2 = arith.maximumf %0, %1 : vector<8x128xf32>
    %3 = arith.addf %0, %1 : vector<8x128xf32>
    %cst = arith.constant dense<0xFF800000> : vector<8xf32>
    %4 = vector.multi_reduction <maximumf>, %2, %cst [1] : vector<8x128xf32> to vector<8xf32>
    %cst_2 = arith.constant 1.000000e+00 : f32
    %5 = vector.broadcast %cst_2 : f32 to vector<128x1xf32>
    %cst_3 = arith.constant dense<0.000000e+00> : vector<8x1xf32>
    %6 = tpu.matmul %3, %5, %cst_3 {dimension_numbers = #tpu.dot_dimension_numbers<[1], [0], [0], [1], [0, 0, 1, 1], [], []>, precision = #tpu.contract_precision<fp32>} : vector<8x128xf32>, vector<128x1xf32>, vector<8x1xf32> -> vector<8x1xf32>
    %7 = vector.shape_cast %6 : vector<8x1xf32> to vector<8xf32>
    %cst_4 = arith.constant 2.560000e+02 : f32
    %8 = vector.broadcast %cst_4 : f32 to vector<8xf32>
    %9 = arith.divf %7, %8 : vector<8xf32>
    %c0_5 = arith.constant 0 : index
    %c0_6 = arith.constant 0 : index
    %10 = vector.load %arg2[%c0_5, %c0_6] : memref<2x8xf32, #tpu.memory_space<vmem>>, vector<1x8xf32>
    %11 = vector.shape_cast %10 : vector<1x8xf32> to vector<8xf32>
    %12 = vector.shape_cast %4 : vector<8xf32> to vector<1x8xf32>
    tpu.vector_store %arg2[%c0_5, %c0_6], %12 {strides = array<i32>} : memref<2x8xf32, #tpu.memory_space<vmem>>, vector<1x8xf32>,
    %c1 = arith.constant 1 : index
    %c0_7 = arith.constant 0 : index
    %13 = vector.load %arg2[%c1, %c0_7] : memref<2x8xf32, #tpu.memory_space<vmem>>, vector<1x8xf32>
    %14 = vector.shape_cast %13 : vector<1x8xf32> to vector<8xf32>
    %15 = vector.shape_cast %9 : vector<8xf32> to vector<1x8xf32>
    tpu.vector_store %arg2[%c1, %c0_7], %15 {strides = array<i32>} : memref<2x8xf32, #tpu.memory_space<vmem>>, vector<1x8xf32>,
    return
  }
  func.func @transform_0(%arg0: i32) -> (i32, i32) {
    %c0_i32 = arith.constant 0 : i32
    %c0_i32_0 = arith.constant 0 : i32
    return %arg0, %c0_i32 : i32, i32
  }
  func.func @transform_1(%arg0: i32) -> (i32, i32) {
    %c0_i32 = arith.constant 0 : i32
    %c0_i32_0 = arith.constant 0 : i32
    return %c0_i32, %arg0 : i32, i32
  }
}

</mosaic_0001>

<llo_original>
// kernel: tpu_custom_call.1
$region0: #{tpu_custom_call.1}
  #allocation0 [shape = 'u32[]', space=smem, size = 0x4, offset = 0x4, fixed_abs, tag = 'smem constant byte address 0x4 - core index']
  #allocation1 [shape = 'u32[144,128]{1,0:T(1,128)}', space=vmem, size = 0x12000, scoped, tag = 'internal scratch']
  %s0 = inlined_call_operand.hbm [shape: f32[8,256], index: 0, kind: input, shape index: {}]
  %s1 = inlined_call_operand.hbm [shape: f32[2,8], index: 1, kind: output, shape index: {}]
  %s2 = sld [smem:[#allocation0]]
  $region18: #{tpu_custom_call.1} parent=0
    _
  %s4 = ssub.s32 1, %s2
  %s5 = scalar_select 0, %s4, %s2
  $region1: #{tpu_custom_call.1} parent=0
    #allocation2 [shape = 'u8[8192]{0}', space=vmem, size = 0x2000, scoped, tag = 'input window, operand 0, single buffered']
    #allocation3 [shape = 's32[1]{0}', space=sflag, size = 0x4, scoped, tag = 'scoped memory for tpu_custom_call.1']
    #allocation4 [shape = 's32[1]{0}', space=sflag, size = 0x4, scoped, tag = 'scoped memory for tpu_custom_call.1']
    #allocation5 [shape = 'u8[1024]{0}', space=vmem, size = 0x400, scoped, tag = 'output window, operand 0, single buffered']
    %6 = vsyncpa [#allocation3], 0
    %7 = vsyncpa [#allocation4], 0
    // Predicated region
    $region2: #{tpu_custom_call.1} parent=1 // pred_check
      _
    $region3: #{tpu_custom_call.1} parent=1 // pred_check_branch
      %9 = sbr.rel (0) target = $region5
    $region4: #{tpu_custom_call.1} parent=1 // pred_region
      %s11 = ssub.s32 256, 256
      %12 = vsyncadd [#allocation3], %s11
      %s14 = sshll.u32 [#allocation2], 4
      %s15 = int_to_ptr.vmem [resolvable:$true] %s14
      %17 = dma.hbm_to_vmem [thread:$0]  %s0, 256, %s15, [#allocation3]
    $region5: #{tpu_custom_call.1} parent=1 // pred_fallthru
      _
    // Predicated region
    $region6: #{tpu_custom_call.1} parent=1 // pred_check
      _
    $region7: #{tpu_custom_call.1} parent=1 // pred_check_branch
      %19 = sbr.rel (0) target = $region9
    $region8: #{tpu_custom_call.1} parent=1 // pred_region
      %20 = dma.done [#allocation3], 256
    $region9: #{tpu_custom_call.1} parent=1 // pred_fallthru
      _
    %v21 = vld [vmem:[#allocation2] sm:$0xff]
    %v22 = vld [vmem:[#allocation2 + $0x8] sm:$0xff]
    %v23 = vmax.f32 %v21, %v22
    %v24 = vadd.f32 %v21, %v22
    %25 = vmax.xlane.f32.xlu0 %v23
    %v26 = vpop.xlane.xlu0 %25
    %27 = vmatprep.subr.mxu0 0.0
    %28 = vmatpush1.msra.mxu0 1.0
    %29 = vmatprep.subr.mxu0 0.0
    %30 = vmatpush1.msra.mxu0 1.0
    %31 = vmatprep.subr.mxu0 0.0
    %32 = vmatpush1.msra.mxu0 1.0
    %33 = vmatprep.subr.mxu0 0.0
    %34 = vmatpush1.msra.mxu0 1.0
    %35 = vmatprep.subr.mxu0 0.0
    %36 = vmatpush1.msra.mxu0 1.0
    %37 = vmatprep.subr.mxu0 0.0
    %38 = vmatpush1.msra.mxu0 1.0
    %39 = vmatprep.subr.mxu0 0.0
    %40 = vmatpush1.msra.mxu0 1.0
    %41 = vmatprep.subr.mxu0 0.0
    %42 = vmatpush1.msra.mxu0 1.0
    %43 = vmatprep.subr.mxu0 0.0
    %44 = vmatpush1.msra.mxu0 1.0
    %45 = vmatprep.subr.mxu0 0.0
    %46 = vmatpush1.msra.mxu0 1.0
    %47 = vmatprep.subr.mxu0 0.0
    %48 = vmatpush1.msra.mxu0 1.0
    %49 = vmatprep.subr.mxu0 0.0
    %50 = vmatpush1.msra.mxu0 1.0
    %51 = vmatprep.subr.mxu0 0.0
    %52 = vmatpush1.msra.mxu0 1.0
    %53 = vmatprep.subr.mxu0 0.0
    %54 = vmatpush1.msra.mxu0 1.0
    %55 = vmatprep.subr.mxu0 0.0
    %56 = vmatpush1.msra.mxu0 1.0
    %57 = vmatprep.subr.mxu0 0.0
    %58 = vmatpush1.msra.mxu0 1.0
    %59 = vmatprep.subr.mxu0 0.0
    %60 = vmatpush1.msra.mxu0 0.0
    %61 = vmatprep.subr.mxu0 0.0
    %62 = vmatpush1.msra.mxu0 0.0
    %63 = vmatprep.subr.mxu0 0.0
    %64 = vmatpush1.msra.mxu0 0.0
    %65 = vmatprep.subr.mxu0 0.0
    %66 = vmatpush1.msra.mxu0 0.0
    %67 = vmatprep.subr.mxu0 0.0
    %68 = vmatpush1.msra.mxu0 0.0
    %69 = vmatprep.subr.mxu0 0.0
    %70 = vmatpush1.msra.mxu0 0.0
    %71 = vmatprep.subr.mxu0 0.0
    %72 = vmatpush1.msra.mxu0 0.0
    %73 = vmatprep.subr.mxu0 0.0
    %74 = vmatpush1.msra.mxu0 0.0
    %75 = vmatprep.subr.mxu0 0.0
    %76 = vmatpush1.msra.mxu0 0.0
    %77 = vmatprep.subr.mxu0 0.0
    %78 = vmatpush1.msra.mxu0 0.0
    %79 = vmatprep.subr.mxu0 0.0
    %80 = vmatpush1.msra.mxu0 0.0
    %81 = vmatprep.subr.mxu0 0.0
    %82 = vmatpush1.msra.mxu0 0.0
    %83 = vmatprep.subr.mxu0 0.0
    %84 = vmatpush1.msra.mxu0 0.0
    %85 = vmatprep.subr.mxu0 0.0
    %86 = vmatpush1.msra.mxu0 0.0
    %87 = vmatprep.subr.mxu0 0.0
    %88 = vmatpush1.msra.mxu0 0.0
    %89 = vmatprep.subr.mxu0 0.0
    %90 = vmatpush1.msra.mxu0 0.0
    %91 = vmatprep.mubr.f32.mxu0 0.0
    %v92 = vand.u32 %v24, 4294901760
    %v93 = vsub.f32 %v24, %v92
    %v94 = vand.u32 %v93, 4294901760
    %v95 = vsub.f32 %v93, %v94
    %v96 = vand.u32 %v95, 4294901760
    %97 = vmatmul.mubr.f32.gmra.mrb[0].mxu0 %v96
    %v98 = vpop.f32.mrb[0].mxu0
    %v99 = vadd.f32 0.0, %v98
    %v100 = vpop.f32.mrb[0].mxu0
    %101 = vdwg.mxu0
    %102 = vmatprep.subr.mxu0 0.0
    %103 = vmatpush1.msra.mxu0 0.0
    %104 = vmatprep.subr.mxu0 0.0
    %105 = vmatpush1.msra.mxu0 0.0
    %106 = vmatprep.subr.mxu0 0.0
    %107 = vmatpush1.msra.mxu0 0.0
    %108 = vmatprep.subr.mxu0 0.0
    %109 = vmatpush1.msra.mxu0 0.0
    %110 = vmatprep.subr.mxu0 0.0
    %111 = vmatpush1.msra.mxu0 0.0
    %112 = vmatprep.subr.mxu0 0.0
    %113 = vmatpush1.msra.mxu0 0.0
    %114 = vmatprep.subr.mxu0 0.0
    %115 = vmatpush1.msra.mxu0 0.0
    %116 = vmatprep.subr.mxu0 0.0
    %117 = vmatpush1.msra.mxu0 0.0
    %118 = vmatprep.subr.mxu0 0.0
    %119 = vmatpush1.msra.mxu0 0.0
    %120 = vmatprep.subr.mxu0 0.0
    %121 = vmatpush1.msra.mxu0 0.0
    %122 = vmatprep.subr.mxu0 0.0
    %123 = vmatpush1.msra.mxu0 0.0
    %124 = vmatprep.subr.mxu0 0.0
    %125 = vmatpush1.msra.mxu0 0.0
    %126 = vmatprep.subr.mxu0 0.0
    %127 = vmatpush1.msra.mxu0 0.0
    %128 = vmatprep.subr.mxu0 0.0
    %129 = vmatpush1.msra.mxu0 0.0
    %130 = vmatprep.subr.mxu0 0.0
    %131 = vmatpush1.msra.mxu0 0.0
    %132 = vmatprep.subr.mxu0 0.0
    %133 = vmatpush1.msra.mxu0 0.0
    %134 = vmatprep.subr.mxu0 0.0
    %135 = vmatpush1.msra.mxu0 0.0
    %136 = vmatprep.subr.mxu0 0.0
    %137 = vmatpush1.msra.mxu0 0.0
    %138 = vmatprep.subr.mxu0 0.0
    %139 = vmatpush1.msra.mxu0 0.0
    %140 = vmatprep.subr.mxu0 0.0
    %141 = vmatpush1.msra.mxu0 0.0
    %142 = vmatprep.subr.mxu0 0.0
    %143 = vmatpush1.msra.mxu0 0.0
    %144 = vmatprep.subr.mxu0 0.0
    %145 = vmatpush1.msra.mxu0 0.0
    %146 = vmatprep.subr.mxu0 0.0
    %147 = vmatpush1.msra.mxu0 0.0
    %148 = vmatprep.subr.mxu0 0.0
    %149 = vmatpush1.msra.mxu0 0.0
    %150 = vmatprep.subr.mxu0 0.0
    %151 = vmatpush1.msra.mxu0 0.0
    %152 = vmatprep.subr.mxu0 0.0
    %153 = vmatpush1.msra.mxu0 0.0
    %154 = vmatprep.subr.mxu0 0.0
    %155 = vmatpush1.msra.mxu0 0.0
    %156 = vmatprep.subr.mxu0 0.0
    %157 = vmatpush1.msra.mxu0 0.0
    %158 = vmatprep.subr.mxu0 0.0
    %159 = vmatpush1.msra.mxu0 0.0
    %160 = vmatprep.subr.mxu0 0.0
    %161 = vmatpush1.msra.mxu0 0.0
    %162 = vmatprep.subr.mxu0 0.0
    %163 = vmatpush1.msra.mxu0 0.0
    %164 = vmatprep.subr.mxu0 0.0
    %165 = vmatpush1.msra.mxu0 0.0
    %166 = vmatprep.mubr.f32.mxu0 0.0
    %v167 = vand.u32 %v24, 4294901760
    %168 = vmatmul.mubr.f32.gmra.mrb[0].mxu0 %v167
    %v169 = vpop.f32.mrb[0].mxu0
    %v170 = vadd.f32 %v99, %v169
    %v171 = vpop.f32.mrb[0].mxu0
    %172 = vdwg.mxu0
    %173 = vmatprep.subr.mxu0 0.0
    %174 = vmatpush1.msra.mxu0 0.0
    %175 = vmatprep.subr.mxu0 0.0
    %176 = vmatpush1.msra.mxu0 0.0
    %177 = vmatprep.subr.mxu0 0.0
    %178 = vmatpush1.msra.mxu0 0.0
    %179 = vmatprep.subr.mxu0 0.0
    %180 = vmatpush1.msra.mxu0 0.0
    %181 = vmatprep.subr.mxu0 0.0
    %182 = vmatpush1.msra.mxu0 0.0
    %183 = vmatprep.subr.mxu0 0.0
    %184 = vmatpush1.msra.mxu0 0.0
    %185 = vmatprep.subr.mxu0 0.0
    %186 = vmatpush1.msra.mxu0 0.0
    %187 = vmatprep.subr.mxu0 0.0
    %188 = vmatpush1.msra.mxu0 0.0
    %189 = vmatprep.subr.mxu0 0.0
    %190 = vmatpush1.msra.mxu0 0.0
    %191 = vmatprep.subr.mxu0 0.0
    %192 = vmatpush1.msra.mxu0 0.0
    %193 = vmatprep.subr.mxu0 0.0
    %194 = vmatpush1.msra.mxu0 0.0
    %195 = vmatprep.subr.mxu0 0.0
    %196 = vmatpush1.msra.mxu0 0.0
    %197 = vmatprep.subr.mxu0 0.0
    %198 = vmatpush1.msra.mxu0 0.0
    %199 = vmatprep.subr.mxu0 0.0
    %200 = vmatpush1.msra.mxu0 0.0
    %201 = vmatprep.subr.mxu0 0.0
    %202 = vmatpush1.msra.mxu0 0.0
    %203 = vmatprep.subr.mxu0 0.0
    %204 = vmatpush1.msra.mxu0 0.0
    %205 = vmatprep.subr.mxu0 0.0
    %206 = vmatpush1.msra.mxu0 0.0
    %207 = vmatprep.subr.mxu0 0.0
    %208 = vmatpush1.msra.mxu0 0.0
    %209 = vmatprep.subr.mxu0 0.0
    %210 = vmatpush1.msra.mxu0 0.0
    %211 = vmatprep.subr.mxu0 0.0
    %212 = vmatpush1.msra.mxu0 0.0
    %213 = vmatprep.subr.mxu0 0.0
    %214 = vmatpush1.msra.mxu0 0.0
    %215 = vmatprep.subr.mxu0 0.0
    %216 = vmatpush1.msra.mxu0 0.0
    %217 = vmatprep.subr.mxu0 0.0
    %218 = vmatpush1.msra.mxu0 0.0
    %219 = vmatprep.subr.mxu0 0.0
    %220 = vmatpush1.msra.mxu0 0.0
    %221 = vmatprep.subr.mxu0 0.0
    %222 = vmatpush1.msra.mxu0 0.0
    %223 = vmatprep.subr.mxu0 0.0
    %224 = vmatpush1.msra.mxu0 0.0
    %225 = vmatprep.subr.mxu0 0.0
    %226 = vmatpush1.msra.mxu0 0.0
    %227 = vmatprep.subr.mxu0 0.0
    %228 = vmatpush1.msra.mxu0 0.0
    %229 = vmatprep.subr.mxu0 0.0
    %230 = vmatpush1.msra.mxu0 0.0
    %231 = vmatprep.subr.mxu0 0.0
    %232 = vmatpush1.msra.mxu0 0.0
    %233 = vmatprep.subr.mxu0 0.0
    %234 = vmatpush1.msra.mxu0 0.0
    %235 = vmatprep.subr.mxu0 0.0
    %236 = vmatpush1.msra.mxu0 0.0
    %237 = vmatprep.mubr.f32.mxu0 0.0
    %v238 = vand.u32 %v24, 4294901760
    %v239 = vsub.f32 %v24, %v238
    %240 = vmatmul.mubr.f32.gmra.mrb[0].mxu0 %v239
    %v241 = vpop.f32.mrb[0].mxu0
    %v242 = vadd.f32 %v170, %v241
    %v243 = vpop.f32.mrb[0].mxu0
    %244 = vdwg.mxu0
    %245 = vmatprep.subr.mxu0 0.0
    %246 = vmatpush1.msra.mxu0 1.0
    %247 = vmatprep.subr.mxu0 0.0
    %248 = vmatpush1.msra.mxu0 1.0
    %249 = vmatprep.subr.mxu0 0.0
    %250 = vmatpush1.msra.mxu0 1.0
    %251 = vmatprep.subr.mxu0 0.0
    %252 = vmatpush1.msra.mxu0 1.0
    %253 = vmatprep.subr.mxu0 0.0
    %254 = vmatpush1.msra.mxu0 1.0
    %255 = vmatprep.subr.mxu0 0.0
    %256 = vmatpush1.msra.mxu0 1.0
    %257 = vmatprep.subr.mxu0 0.0
    %258 = vmatpush1.msra.mxu0 1.0
    %259 = vmatprep.subr.mxu0 0.0
    %260 = vmatpush1.msra.mxu0 1.0
    %261 = vmatprep.subr.mxu0 0.0
    %262 = vmatpush1.msra.mxu0 1.0
    %263 = vmatprep.subr.mxu0 0.0
    %264 = vmatpush1.msra.mxu0 1.0
    %265 = vmatprep.subr.mxu0 0.0
    %266 = vmatpush1.msra.mxu0 1.0
    %267 = vmatprep.subr.mxu0 0.0
    %268 = vmatpush1.msra.mxu0 1.0
    %269 = vmatprep.subr.mxu0 0.0
    %270 = vmatpush1.msra.mxu0 1.0
    %271 = vmatprep.subr.mxu0 0.0
    %272 = vmatpush1.msra.mxu0 1.0
    %273 = vmatprep.subr.mxu0 0.0
    %274 = vmatpush1.msra.mxu0 1.0
    %275 = vmatprep.subr.mxu0 0.0
    %276 = vmatpush1.msra.mxu0 1.0
    %277 = vmatprep.subr.mxu0 0.0
    %278 = vmatpush1.msra.mxu0 0.0
    %279 = vmatprep.subr.mxu0 0.0
    %280 = vmatpush1.msra.mxu0 0.0
    %281 = vmatprep.subr.mxu0 0.0
    %282 = vmatpush1.msra.mxu0 0.0
    %283 = vmatprep.subr.mxu0 0.0
    %284 = vmatpush1.msra.mxu0 0.0
    %285 = vmatprep.subr.mxu0 0.0
    %286 = vmatpush1.msra.mxu0 0.0
    %287 = vmatprep.subr.mxu0 0.0
    %288 = vmatpush1.msra.mxu0 0.0
    %289 = vmatprep.subr.mxu0 0.0
    %290 = vmatpush1.msra.mxu0 0.0
    %291 = vmatprep.subr.mxu0 0.0
    %292 = vmatpush1.msra.mxu0 0.0
    %293 = vmatprep.subr.mxu0 0.0
    %294 = vmatpush1.msra.mxu0 0.0
    %295 = vmatprep.subr.mxu0 0.0
    %296 = vmatpush1.msra.mxu0 0.0
    %297 = vmatprep.subr.mxu0 0.0
    %298 = vmatpush1.msra.mxu0 0.0
    %299 = vmatprep.subr.mxu0 0.0
    %300 = vmatpush1.msra.mxu0 0.0
    %301 = vmatprep.subr.mxu0 0.0
    %302 = vmatpush1.msra.mxu0 0.0
    %303 = vmatprep.subr.mxu0 0.0
    %304 = vmatpush1.msra.mxu0 0.0
    %305 = vmatprep.subr.mxu0 0.0
    %306 = vmatpush1.msra.mxu0 0.0
    %307 = vmatprep.subr.mxu0 0.0
    %308 = vmatpush1.msra.mxu0 0.0
    %309 = vmatprep.mubr.f32.mxu0 0.0
    %v310 = vand.u32 %v24, 4294901760
    %v311 = vsub.f32 %v24, %v310
    %v312 = vand.u32 %v311, 4294901760
    %313 = vmatmul.mubr.f32.gmra.mrb[0].mxu0 %v312
    %v314 = vpop.f32.mrb[0].mxu0
    %v315 = vadd.f32 %v242, %v314
    %v316 = vpop.f32.mrb[0].mxu0
    %317 = vdwg.mxu0
    %318 = vmatprep.subr.mxu0 0.0
    %319 = vmatpush1.msra.mxu0 0.0
    %320 = vmatprep.subr.mxu0 0.0
    %321 = vmatpush1.msra.mxu0 0.0
    %322 = vmatprep.subr.mxu0 0.0
    %323 = vmatpush1.msra.mxu0 0.0
    %324 = vmatprep.subr.mxu0 0.0
    %325 = vmatpush1.msra.mxu0 0.0
    %326 = vmatprep.subr.mxu0 0.0
    %327 = vmatpush1.msra.mxu0 0.0
    %328 = vmatprep.subr.mxu0 0.0
    %329 = vmatpush1.msra.mxu0 0.0
    %330 = vmatprep.subr.mxu0 0.0
    %331 = vmatpush1.msra.mxu0 0.0
    %332 = vmatprep.subr.mxu0 0.0
    %333 = vmatpush1.msra.mxu0 0.0
    %334 = vmatprep.subr.mxu0 0.0
    %335 = vmatpush1.msra.mxu0 0.0
    %336 = vmatprep.subr.mxu0 0.0
    %337 = vmatpush1.msra.mxu0 0.0
    %338 = vmatprep.subr.mxu0 0.0
    %339 = vmatpush1.msra.mxu0 0.0
    %340 = vmatprep.subr.mxu0 0.0
    %341 = vmatpush1.msra.mxu0 0.0
    %342 = vmatprep.subr.mxu0 0.0
    %343 = vmatpush1.msra.mxu0 0.0
    %344 = vmatprep.subr.mxu0 0.0
    %345 = vmatpush1.msra.mxu0 0.0
    %346 = vmatprep.subr.mxu0 0.0
    %347 = vmatpush1.msra.mxu0 0.0
    %348 = vmatprep.subr.mxu0 0.0
    %349 = vmatpush1.msra.mxu0 0.0
    %350 = vmatprep.subr.mxu0 0.0
    %351 = vmatpush1.msra.mxu0 0.0
    %352 = vmatprep.subr.mxu0 0.0
    %353 = vmatpush1.msra.mxu0 0.0
    %354 = vmatprep.subr.mxu0 0.0
    %355 = vmatpush1.msra.mxu0 0.0
    %356 = vmatprep.subr.mxu0 0.0
    %357 = vmatpush1.msra.mxu0 0.0
    %358 = vmatprep.subr.mxu0 0.0
    %359 = vmatpush1.msra.mxu0 0.0
    %360 = vmatprep.subr.mxu0 0.0
    %361 = vmatpush1.msra.mxu0 0.0
    %362 = vmatprep.subr.mxu0 0.0
    %363 = vmatpush1.msra.mxu0 0.0
    %364 = vmatprep.subr.mxu0 0.0
    %365 = vmatpush1.msra.mxu0 0.0
    %366 = vmatprep.subr.mxu0 0.0
    %367 = vmatpush1.msra.mxu0 0.0
    %368 = vmatprep.subr.mxu0 0.0
    %369 = vmatpush1.msra.mxu0 0.0
    %370 = vmatprep.subr.mxu0 0.0
    %371 = vmatpush1.msra.mxu0 0.0
    %372 = vmatprep.subr.mxu0 0.0
    %373 = vmatpush1.msra.mxu0 0.0
    %374 = vmatprep.subr.mxu0 0.0
    %375 = vmatpush1.msra.mxu0 0.0
    %376 = vmatprep.subr.mxu0 0.0
    %377 = vmatpush1.msra.mxu0 0.0
    %378 = vmatprep.subr.mxu0 0.0
    %379 = vmatpush1.msra.mxu0 0.0
    %380 = vmatprep.subr.mxu0 0.0
    %381 = vmatpush1.msra.mxu0 0.0
    %382 = vmatprep.mubr.f32.mxu0 0.0
    %v383 = vand.u32 %v24, 4294901760
    %384 = vmatmul.mubr.f32.gmra.mrb[0].mxu0 %v383
    %v385 = vpop.f32.mrb[0].mxu0
    %v386 = vadd.f32 %v315, %v385
    %v387 = vpop.f32.mrb[0].mxu0
    %388 = vdwg.mxu0
    %389 = vmatprep.subr.mxu0 0.0
    %390 = vmatpush1.msra.mxu0 1.0
    %391 = vmatprep.subr.mxu0 0.0
    %392 = vmatpush1.msra.mxu0 1.0
    %393 = vmatprep.subr.mxu0 0.0
    %394 = vmatpush1.msra.mxu0 1.0
    %395 = vmatprep.subr.mxu0 0.0
    %396 = vmatpush1.msra.mxu0 1.0
    %397 = vmatprep.subr.mxu0 0.0
    %398 = vmatpush1.msra.mxu0 1.0
    %399 = vmatprep.subr.mxu0 0.0
    %400 = vmatpush1.msra.mxu0 1.0
    %401 = vmatprep.subr.mxu0 0.0
    %402 = vmatpush1.msra.mxu0 1.0
    %403 = vmatprep.subr.mxu0 0.0
    %404 = vmatpush1.msra.mxu0 1.0
    %405 = vmatprep.subr.mxu0 0.0
    %406 = vmatpush1.msra.mxu0 1.0
    %407 = vmatprep.subr.mxu0 0.0
    %408 = vmatpush1.msra.mxu0 1.0
    %409 = vmatprep.subr.mxu0 0.0
    %410 = vmatpush1.msra.mxu0 1.0
    %411 = vmatprep.subr.mxu0 0.0
    %412 = vmatpush1.msra.mxu0 1.0
    %413 = vmatprep.subr.mxu0 0.0
    %414 = vmatpush1.msra.mxu0 1.0
    %415 = vmatprep.subr.mxu0 0.0
    %416 = vmatpush1.msra.mxu0 1.0
    %417 = vmatprep.subr.mxu0 0.0
    %418 = vmatpush1.msra.mxu0 1.0
    %419 = vmatprep.subr.mxu0 0.0
    %420 = vmatpush1.msra.mxu0 1.0
    %421 = vmatprep.subr.mxu0 0.0
    %422 = vmatpush1.msra.mxu0 0.0
    %423 = vmatprep.subr.mxu0 0.0
    %424 = vmatpush1.msra.mxu0 0.0
    %425 = vmatprep.subr.mxu0 0.0
    %426 = vmatpush1.msra.mxu0 0.0
    %427 = vmatprep.subr.mxu0 0.0
    %428 = vmatpush1.msra.mxu0 0.0
    %429 = vmatprep.subr.mxu0 0.0
    %430 = vmatpush1.msra.mxu0 0.0
    %431 = vmatprep.subr.mxu0 0.0
    %432 = vmatpush1.msra.mxu0 0.0
    %433 = vmatprep.subr.mxu0 0.0
    %434 = vmatpush1.msra.mxu0 0.0
    %435 = vmatprep.subr.mxu0 0.0
    %436 = vmatpush1.msra.mxu0 0.0
    %437 = vmatprep.subr.mxu0 0.0
    %438 = vmatpush1.msra.mxu0 0.0
    %439 = vmatprep.subr.mxu0 0.0
    %440 = vmatpush1.msra.mxu0 0.0
    %441 = vmatprep.subr.mxu0 0.0
    %442 = vmatpush1.msra.mxu0 0.0
    %443 = vmatprep.subr.mxu0 0.0
    %444 = vmatpush1.msra.mxu0 0.0
    %445 = vmatprep.subr.mxu0 0.0
    %446 = vmatpush1.msra.mxu0 0.0
    %447 = vmatprep.subr.mxu0 0.0
    %448 = vmatpush1.msra.mxu0 0.0
    %449 = vmatprep.subr.mxu0 0.0
    %450 = vmatpush1.msra.mxu0 0.0
    %451 = vmatprep.subr.mxu0 0.0
    %452 = vmatpush1.msra.mxu0 0.0
    %453 = vmatprep.mubr.f32.mxu0 0.0
    %v454 = vand.u32 %v24, 4294901760
    %455 = vmatmul.mubr.f32.gmra.mrb[0].mxu0 %v454
    %v456 = vpop.f32.mrb[0].mxu0
    %v457 = vadd.f32 %v386, %v456
    %v458 = vpop.f32.mrb[0].mxu0
    %459 = vdwg.mxu0
    %v460 = vrcp.pop 256.0
    %v461 = vmul.f32 %v457, %v460
    %v463 = vlaneseq
    %v464 = vand.u32 %v463, 127
    %v465 = vlaneseq
    %v466 = vshrl.u32 %v465, 7
    %v467 = vsub.s32 %v464, %v466
    %v468 = vrot.slane %v26, %v467
    %vm470 = vcmask 57344
    %471 = vst.msk [vmem:[#allocation5] sm:$0x1] %vm470, %v468
    %473 = vset.pattern.permute.xlu0 0
    %474 = vperm.xlu0 %473, %v461
    %v475 = vpop.permute.xlu0 %474
    %v476 = vlaneseq
    %v477 = vshrl.u32 %v476, 7
    %v478 = vsub.s32 %v464, %v477
    %v479 = vrot.slane %v475, %v478
    %481 = vst.msk [vmem:[#allocation5 + $0x1] sm:$0x1] %vm470, %v479
    // Predicated region
    $region10: #{tpu_custom_call.1} parent=1 // pred_check
      _
    $region11: #{tpu_custom_call.1} parent=1 // pred_check_branch
      %483 = sbr.rel (0) target = $region13
    $region12: #{tpu_custom_call.1} parent=1 // pred_region
      %s485 = ssub.s32 32, 32
      %486 = vsyncadd [#allocation4], %s485
      %s488 = sshll.u32 [#allocation5], 4
      %s489 = int_to_ptr.vmem [resolvable:$true] %s488
      %491 = dma.vmem_to_hbm [thread:$0]  %s489, 32, %s1, [#allocation4]
    $region13: #{tpu_custom_call.1} parent=1 // pred_fallthru
      _
    // Predicated region
    $region14: #{tpu_custom_call.1} parent=1 // pred_check
      _
    $region15: #{tpu_custom_call.1} parent=1 // pred_check_branch
      %493 = sbr.rel (0) target = $region17
    $region16: #{tpu_custom_call.1} parent=1 // pred_region
      %494 = dma.done [#allocation4], 32
    $region17: #{tpu_custom_call.1} parent=1 // pred_fallthru
      _
    %495 = vsyncpa [#allocation3], 1
    %496 = vsyncpa [#allocation4], 1

</llo_original>
